<compile_context>
chip_gen: v6e
topology: v6e:2x2x1
jax: 0.10.0
libtpu: 0.0.40
codegen_flags: <defaults>
</compile_context>

<pallas_src>
import functools
import math

import jax
import jax.numpy as jnp
from jax.experimental import pallas as pl
from jax.experimental.pallas import tpu as pltpu


# --------------------- Kernel 1: fused q/k projection ------------------------


def _qk_proj_kernel(x_ref, wqk_ref, bqk_ref, q_ref, k_ref):
    # x_ref: (S, H) block   wqk_ref: (H, 2D) resident   bqk_ref: (1, 2D) resident
    # q_ref / k_ref: (S, D) blocks for the current turn.
    d = q_ref.shape[-1]
    # One 2D=256-wide matmul keeps the v6e/v7x MXU fully busy (harmless on v5e).
    # HIGHEST precision only matters for f32 inputs (bf16 inputs are native).
    qk = jnp.dot(x_ref[...], wqk_ref[...],
                 preferred_element_type=jnp.float32,
                 precision=jax.lax.Precision.HIGHEST)          # (S, 2D) f32
    qk = qk + bqk_ref[...].astype(jnp.float32)
    q_ref[...] = qk[:, :d].astype(q_ref.dtype)                 # lane-dense 128-wide writes
    k_ref[...] = qk[:, d:].astype(k_ref.dtype)


# --------------- Kernel 2: causal joint softmax + turn mixing ----------------


def _qaq_mix_kernel(x_ref, q_ref, k_ref, o_ref, acc_ref, *, scale):
    # x_ref: (N, S, H) whole-array VMEM resident (single buffered)
    # q_ref: (S, D) block for turn i
    # k_ref: (N, S, D) whole-array VMEM resident (single buffered)
    # o_ref: (S, H) output block for turn i
    # acc_ref: (S, H) f32 VMEM scratch accumulator
    i = pl.program_id(0)

    @pl.when(i == 0)
    def _():
        # Turn 0 is a pure passthrough (new_x[0] = x[0]).  Kept in-kernel: the
        # wrapper-side alternative (dynamic_update_slice) costs a full-array
        # XLA copy, strictly worse than this single (S, H) VMEM copy.
        o_ref[...] = x_ref[0].astype(o_ref.dtype)

    @pl.when(i != 0)
    def _():
        q_i = q_ref[...].astype(jnp.float32)                    # (S, D)

        def scores_for(j):
            # Per-turn score; recomputed in pass 2 ((S*D) work) instead of an
            # (N, S) scratch -- ~6x cheaper than the (S, H) mix it feeds.
            k_j = k_ref[j].astype(jnp.float32)                  # (S, D)
            return jnp.sum(q_i * k_j, axis=-1, keepdims=True) * scale   # (S, 1)

        # Pass 1: online max / denominator of the joint (j, s) softmax,
        # bounded at j <= i (no VPU work on masked turns).
        def stats_body(j, carry):
            m, l = carry                                        # (1,1), (1,1)
            s_j = scores_for(j)
            m_new = jnp.maximum(m, jnp.max(s_j, axis=0, keepdims=True))
            l_new = (l * jnp.exp(m - m_new)
                     + jnp.sum(jnp.exp(s_j - m_new), axis=0, keepdims=True))
            return m_new, l_new

        m0 = jnp.full((1, 1), -jnp.inf, dtype=jnp.float32)
        l0 = jnp.zeros((1, 1), dtype=jnp.float32)
        m, l = jax.lax.fori_loop(0, i + 1, stats_body, (m0, l0))
        # Single exact reciprocal of the (1,1) denominator, broadcast below
        # (no per-element divide on the VALU).
        inv_denom = pl.reciprocal(l, approx=False)

        # Pass 2: mix x rows with alpha, again bounded at j <= i, upcasting
        # one (S, H) slice at a time (no full (N, S, H) f32 temporary).
        acc_ref[...] = jnp.zeros_like(acc_ref)

        def mix_body(j, carry):
            s_j = scores_for(j)
            alpha_j = jnp.exp(s_j - m) * inv_denom              # (S, 1)
            acc_ref[...] += alpha_j * x_ref[j].astype(jnp.float32)
            return carry

        jax.lax.fori_loop(0, i + 1, mix_body, 0)
        o_ref[...] = acc_ref[...].astype(o_ref.dtype)


# -------------------------------- wrappers -----------------------------------


def _vmem_limit_bytes(footprint):
    # Real footprint + headroom for compiler-internal scratch; capped so the
    # request also fits v7x's 64 MiB/TensorCore (v5e/v6e have 128 MiB physical).
    return int(min(max(footprint + (8 << 20), 16 << 20), 48 << 20))


def _qaq_attent_once(x, wq, bq, wk, bk, *, qk_dtype=None):
    N, S, H = x.shape
    D = wq.shape[1]
    qk_dtype = jnp.dtype(x.dtype if qk_dtype is None else qk_dtype)
    x_bytes = jnp.dtype(x.dtype).itemsize
    qk_bytes = qk_dtype.itemsize
    # The original hard-codes 1/sqrt(128); D == 128 there.
    scale = 1.0 / math.sqrt(float(D))

    # Fused wq|wk -> one (H, 2D) weight; bias as a (1, 2D) f32 row.
    wqk = jnp.concatenate([wq, wk], axis=1).astype(x.dtype)
    bqk = jnp.concatenate([bq, bk], axis=0).reshape(1, 2 * D).astype(jnp.float32)

    # ---- Kernel 1: fused q/k projection, grid parallel over turns -----------
    proj_footprint = (2 * S * H * x_bytes            # streamed x blocks (double buffered)
                      + H * 2 * D * x_bytes          # resident fused weight (single copy)
                      + 2 * D * 4                    # resident bias
                      + 2 * 2 * S * D * qk_bytes)    # q/k output blocks (double buffered)
    q, k = pl.pallas_call(
        _qk_proj_kernel,
        out_shape=(jax.ShapeDtypeStruct((N, S, D), qk_dtype),
                   jax.ShapeDtypeStruct((N, S, D), qk_dtype)),
        grid=(N,),
        in_specs=[
            pl.BlockSpec((None, S, H), lambda i: (i, 0, 0)),
            pl.BlockSpec(memory_space=pltpu.MemorySpace.VMEM),   # wqk: whole-array, single buffer
            pl.BlockSpec(memory_space=pltpu.MemorySpace.VMEM),   # bqk: whole-array, single buffer
        ],
        out_specs=(pl.BlockSpec((None, S, D), lambda i: (i, 0, 0)),
                   pl.BlockSpec((None, S, D), lambda i: (i, 0, 0))),
        compiler_params=pltpu.CompilerParams(
            dimension_semantics=("parallel",),
            vmem_limit_bytes=_vmem_limit_bytes(proj_footprint)),
    )(x, wqk, bqk)

    # ---- Kernel 2: causal joint softmax + mixing, grid parallel over turns ---
    mix_footprint = (N * S * H * x_bytes             # x resident (single copy)
                     + N * S * D * qk_bytes          # k resident (single copy)
                     + 2 * S * D * qk_bytes          # streamed q blocks
                     + 2 * S * H * x_bytes           # output blocks
                     + S * H * 4)                    # f32 accumulator scratch
    return pl.pallas_call(
        functools.partial(_qaq_mix_kernel, scale=scale),
        out_shape=jax.ShapeDtypeStruct((N, S, H), x.dtype),
        grid=(N,),
        in_specs=[
            pl.BlockSpec(memory_space=pltpu.MemorySpace.VMEM),   # x: whole-array resident
            pl.BlockSpec((None, S, D), lambda i: (i, 0, 0)),     # q row for turn i
            pl.BlockSpec(memory_space=pltpu.MemorySpace.VMEM),   # k: whole-array resident
        ],
        out_specs=pl.BlockSpec((None, S, H), lambda i: (i, 0, 0)),
        scratch_shapes=[pltpu.VMEM((S, H), jnp.float32)],
        compiler_params=pltpu.CompilerParams(
            dimension_semantics=("parallel",),
            vmem_limit_bytes=_vmem_limit_bytes(mix_footprint)),
    )(x, q, k)


def qaq_attent(x, wq, bq, wk, bk, *, num_layers=1, qk_dtype=None):
    """x: (turns, seq, hidden); wq/wk: (hidden, 128) = transposed torch weight;
    bq/bk: (128,).  qk_dtype=jnp.bfloat16 halves the q/k HBM round trip
    (recommended for production; scores/softmax/accumulation stay f32).
    The layernorm member of the original module is never used in forward."""
    # The original num_layers loop never feeds new_x back into x, so every
    # iteration recomputes an identical result -- compute it exactly once.
    del num_layers
    return _qaq_attent_once(x, wq, bq, wk, bk, qk_dtype=qk_dtype)


def _qaq_attent_ref(x, wq, bq, wk, bk):
    """Pure-JAX reference of the original forward (single application)."""
    N, S, H = x.shape
    D = wq.shape[1]
    scale = 1.0 / math.sqrt(float(D))
    q = x @ wq + bq
    k = x @ wk + bk
    outs = [x[0]]
    for i in range(1, N):
        conf = jnp.einsum("sd,jsd->js", q[i], k[: i + 1]) * scale    # (i+1, S)
        alpha = jax.nn.softmax(conf.reshape(-1)).reshape(i + 1, S)   # joint softmax
        outs.append(jnp.sum(alpha[:, :, None] * x[: i + 1], axis=0))
    return jnp.stack(outs, axis=0)


if __name__ == "__main__":
    # Match the kernel's HIGHEST-precision f32 matmuls in the pure-JAX ref.
    jax.config.update("jax_default_matmul_precision", "highest")

    key = jax.random.PRNGKey(0)
    # Original module: x is (turns, 384, 768) with a 128-dim q/k projection.
    # Small but shape-consistent test: turns=4, seq=8, hidden=32, proj=128.
    turns, seq, hidden, proj = 4, 8, 32, 128

    k_x, k_wq, k_wk, k_bq, k_bk = jax.random.split(key, 5)
    x = jax.random.normal(k_x, (turns, seq, hidden), dtype=jnp.float32)
    # torch nn.Linear weight is (out, in); kernels take the transposed (in, out).
    wq_torch = jax.random.normal(k_wq, (proj, hidden), dtype=jnp.float32) * 0.05
    wk_torch = jax.random.normal(k_wk, (proj, hidden), dtype=jnp.float32) * 0.05
    bq = jax.random.normal(k_bq, (proj,), dtype=jnp.float32) * 0.05
    bk = jax.random.normal(k_bk, (proj,), dtype=jnp.float32) * 0.05
    wq, wk = wq_torch.T, wk_torch.T

    ref = _qaq_attent_ref(x, wq, bq, wk, bk)

    # f32 path: strict check against the pure-JAX reference.
    out = jax.block_until_ready(qaq_attent(x, wq, bq, wk, bk, num_layers=2))
    assert out.shape == x.shape and out.dtype == x.dtype
    err = float(jnp.max(jnp.abs(out - ref)))
    assert jnp.allclose(out, ref, atol=1e-4, rtol=1e-4), err

    # bf16 storage path (production config: halves kernel-2 HBM traffic and
    # resident VMEM); looser tolerance reflects bf16 input rounding only.
    out_bf16 = jax.block_until_ready(
        qaq_attent(x.astype(jnp.bfloat16), wq, bq, wk, bk, qk_dtype=jnp.bfloat16))
    err_bf16 = float(jnp.max(jnp.abs(out_bf16.astype(jnp.float32) - ref)))
    assert err_bf16 < 5e-2, err_bf16

    print("KERNEL_OK")
</pallas_src>

<mosaic_0001>
module attributes {stable_mosaic.version = 11 : i64} {
  func.func @_qk_proj_kernel(%arg0: i32, %arg1: memref<1x8x32xf32, #tpu.memory_space<vmem>>, %arg2: memref<32x256xf32, #tpu.memory_space<vmem>>, %arg3: memref<1x256xf32, #tpu.memory_space<vmem>>, %arg4: memref<1x8x128xf32, #tpu.memory_space<vmem>>, %arg5: memref<1x8x128xf32, #tpu.memory_space<vmem>>) attributes {dimension_semantics = [#tpu.dimension_semantics<parallel>], iteration_bounds = array<i64: 4>, scalar_prefetch = 0 : i64, scratch_operands = 0 : i64, tpu.core_type = #tpu.core_type<tc>, window_params = [{transform_indices = @transform_0, window_bounds = array<i64: 1, 8, 32>}, {pipeline_mode = #tpu.pipeline_mode<synchronous>, transform_indices = @transform_1, window_bounds = array<i64: 32, 256>}, {pipeline_mode = #tpu.pipeline_mode<synchronous>, transform_indices = @transform_2, window_bounds = array<i64: 1, 256>}, {transform_indices = @transform_3, window_bounds = array<i64: 1, 8, 128>}, {transform_indices = @transform_4, window_bounds = array<i64: 1, 8, 128>}]} {
    %c0 = arith.constant 0 : index
    %c0_0 = arith.constant 0 : index
    %c0_1 = arith.constant 0 : index
    %0 = vector.load %arg1[%c0, %c0_0, %c0_1] : memref<1x8x32xf32, #tpu.memory_space<vmem>>, vector<1x8x32xf32>
    %1 = vector.shape_cast %0 : vector<1x8x32xf32> to vector<8x32xf32>
    %c0_2 = arith.constant 0 : index
    %c0_3 = arith.constant 0 : index
    %2 = vector.load %arg2[%c0_2, %c0_3] : memref<32x256xf32, #tpu.memory_space<vmem>>, vector<32x256xf32>
    %cst = arith.constant dense<0.000000e+00> : vector<8x256xf32>
    %3 = tpu.matmul %1, %2, %cst {dimension_numbers = #tpu.dot_dimension_numbers<[1], [0], [0], [1], [0, 0, 1, 1], [], []>, precision = #tpu.contract_precision<fp32>} : vector<8x32xf32>, vector<32x256xf32>, vector<8x256xf32> -> vector<8x256xf32>
    %c0_4 = arith.constant 0 : index
    %c0_5 = arith.constant 0 : index
    %4 = vector.load %arg3[%c0_4, %c0_5] : memref<1x256xf32, #tpu.memory_space<vmem>>, vector<1x256xf32>
    %5 = vector.broadcast %4 : vector<1x256xf32> to vector<8x256xf32>
    %6 = arith.addf %3, %5 : vector<8x256xf32>
    %7 = vector.extract_strided_slice %6 {offsets = [0, 0], sizes = [8, 128], strides = [1, 1]} : vector<8x256xf32> to vector<8x128xf32>
    %c0_6 = arith.constant 0 : index
    %c0_7 = arith.constant 0 : index
    %c0_8 = arith.constant 0 : index
    %8 = vector.load %arg4[%c0_6, %c0_7, %c0_8] : memref<1x8x128xf32, #tpu.memory_space<vmem>>, vector<1x8x128xf32>
    %9 = vector.shape_cast %8 : vector<1x8x128xf32> to vector<8x128xf32>
    %10 = vector.shape_cast %7 : vector<8x128xf32> to vector<1x8x128xf32>
    tpu.vector_store %arg4[%c0_6, %c0_7, %c0_8], %10 {strides = array<i32>} : memref<1x8x128xf32, #tpu.memory_space<vmem>>, vector<1x8x128xf32>,
    %11 = vector.extract_strided_slice %6 {offsets = [0, 128], sizes = [8, 128], strides = [1, 1]} : vector<8x256xf32> to vector<8x128xf32>
    %c0_9 = arith.constant 0 : index
    %c0_10 = arith.constant 0 : index
    %c0_11 = arith.constant 0 : index
    %12 = vector.load %arg5[%c0_9, %c0_10, %c0_11] : memref<1x8x128xf32, #tpu.memory_space<vmem>>, vector<1x8x128xf32>
    %13 = vector.shape_cast %12 : vector<1x8x128xf32> to vector<8x128xf32>
    %14 = vector.shape_cast %11 : vector<8x128xf32> to vector<1x8x128xf32>
    tpu.vector_store %arg5[%c0_9, %c0_10, %c0_11], %14 {strides = array<i32>} : memref<1x8x128xf32, #tpu.memory_space<vmem>>, vector<1x8x128xf32>,
    return
  }
  func.func @transform_0(%arg0: i32) -> (i32, i32, i32) {
    %c0_i32 = arith.constant 0 : i32
    %c0_i32_0 = arith.constant 0 : i32
    %c0_i32_1 = arith.constant 0 : i32
    return %arg0, %c0_i32, %c0_i32_0 : i32, i32, i32
  }
  func.func @transform_1(%arg0: i32) -> (i32, i32) {
    %c0_i32 = arith.constant 0 : i32
    %c0_i32_0 = arith.constant 0 : i32
    %c0_i32_1 = arith.constant 0 : i32
    return %c0_i32, %c0_i32_0 : i32, i32
  }
  func.func @transform_2(%arg0: i32) -> (i32, i32) {
    %c0_i32 = arith.constant 0 : i32
    %c0_i32_0 = arith.constant 0 : i32
    %c0_i32_1 = arith.constant 0 : i32
    return %c0_i32, %c0_i32_0 : i32, i32
  }
  func.func @transform_3(%arg0: i32) -> (i32, i32, i32) {
    %c0_i32 = arith.constant 0 : i32
    %c0_i32_0 = arith.constant 0 : i32
    %c0_i32_1 = arith.constant 0 : i32
    return %arg0, %c0_i32, %c0_i32_0 : i32, i32, i32
  }
  func.func @transform_4(%arg0: i32) -> (i32, i32, i32) {
    %c0_i32 = arith.constant 0 : i32
    %c0_i32_0 = arith.constant 0 : i32
    %c0_i32_1 = arith.constant 0 : i32
    return %arg0, %c0_i32, %c0_i32_0 : i32, i32, i32
  }
}

</mosaic_0001>

<llo_original>
// kernel: tpu_custom_call.1
$region0: #{tpu_custom_call.1}
  #allocation0 [shape = 'u32[]', space=smem, size = 0x4, offset = 0x4, fixed_abs, tag = 'smem constant byte address 0x4 - core index']
  #allocation1 [shape = 'u32[144,128]{1,0:T(1,128)}', space=vmem, size = 0x12000, scoped, tag = 'internal scratch']
  %s0 = inlined_call_operand.hbm [shape: f32[4,8,32], index: 0, kind: input, shape index: {}]
  %s1 = inlined_call_operand.hbm [shape: f32[32,256], index: 1, kind: input, shape index: {}]
  %s2 = inlined_call_operand.vmem [shape: f32[1,256], index: 2, kind: input, shape index: {}]
  %s3 = inlined_call_operand.hbm [shape: f32[4,8,128], index: 3, kind: output, shape index: {0}]
  %s4 = inlined_call_operand.hbm [shape: f32[4,8,128], index: 4, kind: output, shape index: {1}]
  %5 = xla_tuple %s3, %s4
  %s6 = sld [smem:[#allocation0]]
  $region61: #{tpu_custom_call.1} parent=0
    _
  %s8 = ssub.s32 1, %s6
  %s9 = scalar_select 0, %s8, %s6
  $region1: #{tpu_custom_call.1} parent=0
    #allocation2 [shape = 'u8[8192]{0}', space=vmem, size = 0x2000, scoped, tag = 'input window, operand 0']
    #allocation3 [shape = 's32[2]{0}', space=sflag, size = 0x8, scoped, tag = 'scoped memory for tpu_custom_call.1']
    #allocation4 [shape = 's32[2]{0}', space=sflag, size = 0x8, scoped, tag = 'scoped memory for tpu_custom_call.1']
    #allocation5 [shape = 'u8[32768]{0}', space=vmem, size = 0x8000, scoped, tag = 'input window, operand 1, single buffered']
    #allocation6 [shape = 's32[1]{0}', space=sflag, size = 0x4, scoped, tag = 'scoped memory for tpu_custom_call.1']
    #allocation7 [shape = 'u8[8192]{0}', space=vmem, size = 0x2000, scoped, tag = 'output window, operand 0']
    #allocation8 [shape = 'u8[8192]{0}', space=vmem, size = 0x2000, scoped, tag = 'output window, operand 1']
    #allocation9 [shape = 's32[2]{0}', space=sflag, size = 0x8, scoped, tag = 'scoped memory for tpu_custom_call.1']
    %10 = vsyncpa [#allocation3], 0
    %s11 = scalar_lea.sflag [#allocation3], 1
    %12 = vsyncpa %s11, 0
    %13 = vsyncpa [#allocation6], 0
    %14 = vsyncpa [#allocation4], 0
    %s15 = scalar_lea.sflag [#allocation4], 1
    %16 = vsyncpa %s15, 0
    %17 = vsyncpa [#allocation9], 0
    %s18 = scalar_lea.sflag [#allocation9], 1
    %19 = vsyncpa %s18, 0
    loop: start=0, step=1, limit=6
    $region2: #{tpu_custom_call.1} parent=1 // loop_pre_header
      _
    $region3: #{tpu_custom_call.1} parent=1 // loop_header
      %s21 = sphi 0, %s25
      %p22 = scmp.ge.s32.totalorder %s21, 6
      %s31 = sphi 0, %s33
      %s34 = sphi 0, %s31
      %s35 = sphi 0, %s34
      %s51 = sphi 0, %s35
      %s55 = sphi 0, %s55
      %s57 = sphi 0, %s55
      %s58 = sphi 0, %s57
      %s72 = sphi 0, %s58
      %s76 = sphi 0, %s76
      %s78 = sphi 0, %s76
      %s79 = sphi 0, %s78
      %s93 = sphi 0, %s79
      %s99 = sphi 0, %s101
      %s102 = sphi 0, %s99
      %s103 = sphi 0, %s102
      %s119 = sphi 0, %s103
      %s125 = sphi 0, %s127
      %s128 = sphi 0, %s125
      %s129 = sphi 0, %s128
      %s145 = sphi 0, %s129
    $region4: #{tpu_custom_call.1} parent=1 // loop_header_branch
      %24 = sbr.rel (%p22) target = $region8
    $region5: #{tpu_custom_call.1} parent=1 // loop_body
      %s26 = ssub.s32 %s21, 1
      %s27 = ssub.s32 %s21, 2
      %s28 = sadd.s32 %s21, 1
      %s29 = ssub.s32 %s21, %s28
      %p30 = scmp.eq.s32.totalorder %s29, 0
      %s32 = sadd.s32 %s31, 1
      %s33 = scalar_select %p30, %s31, %s32
      %p36 = pneg %p30
      %p37 = scmp.eq.s32.totalorder %s21, 3
      %p38 = por %p36, %p37
      %p39 = scmp.ne.s32.totalorder %s31, %s34
      %p40 = scmp.eq.s32.totalorder %s21, 0
      %p41 = por %p39, %p40
      %p42 = scmp.ne.s32.totalorder %s31, %s34
      %p43 = scmp.eq.s32.totalorder %s26, 3
      %p44 = por %p42, %p43
      %p45 = scmp.ne.s32.totalorder %s34, %s35
      %p46 = scmp.eq.s32.totalorder %s26, 0
      %p47 = por %p45, %p46
      %p48 = scmp.ne.s32.totalorder %s34, %s35
      %p49 = scmp.eq.s32.totalorder %s27, 3
      %p50 = por %p48, %p49
      %p52 = scmp.ne.s32.totalorder %s35, %s51
      %p53 = scmp.eq.s32.totalorder %s27, 0
      %p54 = por %p52, %p53
      %s56 = sadd.s32 %s55, 1
      %p59 = scmp.eq.s32.totalorder %s21, 3
      %p60 = scmp.ne.s32.totalorder %s55, %s57
      %p61 = scmp.eq.s32.totalorder %s21, 0
      %p62 = por %p60, %p61
      %p63 = scmp.ne.s32.totalorder %s55, %s57
      %p64 = scmp.eq.s32.totalorder %s26, 3
      %p65 = por %p63, %p64
      %p66 = scmp.ne.s32.totalorder %s57, %s58
      %p67 = scmp.eq.s32.totalorder %s26, 0
      %p68 = por %p66, %p67
      %p69 = scmp.ne.s32.totalorder %s57, %s58
      %p70 = scmp.eq.s32.totalorder %s27, 3
      %p71 = por %p69, %p70
      %p73 = scmp.ne.s32.totalorder %s58, %s72
      %p74 = scmp.eq.s32.totalorder %s27, 0
      %p75 = por %p73, %p74
      %s77 = sadd.s32 %s76, 1
      %p80 = scmp.eq.s32.totalorder %s21, 3
      %p81 = scmp.ne.s32.totalorder %s76, %s78
      %p82 = scmp.eq.s32.totalorder %s21, 0
      %p83 = por %p81, %p82
      %p84 = scmp.ne.s32.totalorder %s76, %s78
      %p85 = scmp.eq.s32.totalorder %s26, 3
      %p86 = por %p84, %p85
      %p87 = scmp.ne.s32.totalorder %s78, %s79
      %p88 = scmp.eq.s32.totalorder %s26, 0
      %p89 = por %p87, %p88
      %p90 = scmp.ne.s32.totalorder %s78, %s79
      %p91 = scmp.eq.s32.totalorder %s27, 3
      %p92 = por %p90, %p91
      %p94 = scmp.ne.s32.totalorder %s79, %s93
      %p95 = scmp.eq.s32.totalorder %s27, 0
      %p96 = por %p94, %p95
      %s97 = ssub.s32 %s21, %s28
      %p98 = scmp.eq.s32.totalorder %s97, 0
      %s100 = sadd.s32 %s99, 1
      %s101 = scalar_select %p98, %s99, %s100
      %p104 = pneg %p98
      %p105 = scmp.eq.s32.totalorder %s21, 3
      %p106 = por %p104, %p105
      %p107 = scmp.ne.s32.totalorder %s99, %s102
      %p108 = scmp.eq.s32.totalorder %s21, 0
      %p109 = por %p107, %p108
      %p110 = scmp.ne.s32.totalorder %s99, %s102
      %p111 = scmp.eq.s32.totalorder %s26, 3
      %p112 = por %p110, %p111
      %p113 = scmp.ne.s32.totalorder %s102, %s103
      %p114 = scmp.eq.s32.totalorder %s26, 0
      %p115 = por %p113, %p114
      %p116 = scmp.ne.s32.totalorder %s102, %s103
      %p117 = scmp.eq.s32.totalorder %s27, 3
      %p118 = por %p116, %p117
      %p120 = scmp.ne.s32.totalorder %s103, %s119
      %p121 = scmp.eq.s32.totalorder %s27, 0
      %p122 = por %p120, %p121
      %s123 = ssub.s32 %s21, %s28
      %p124 = scmp.eq.s32.totalorder %s123, 0
      %s126 = sadd.s32 %s125, 1
      %s127 = scalar_select %p124, %s125, %s126
      %p130 = pneg %p124
      %p131 = scmp.eq.s32.totalorder %s21, 3
      %p132 = por %p130, %p131
      %p133 = scmp.ne.s32.totalorder %s125, %s128
      %p134 = scmp.eq.s32.totalorder %s21, 0
      %p135 = por %p133, %p134
      %p136 = scmp.ne.s32.totalorder %s125, %s128
      %p137 = scmp.eq.s32.totalorder %s26, 3
      %p138 = por %p136, %p137
      %p139 = scmp.ne.s32.totalorder %s128, %s129
      %p140 = scmp.eq.s32.totalorder %s26, 0
      %p141 = por %p139, %p140
      %p142 = scmp.ne.s32.totalorder %s128, %s129
      %p143 = scmp.eq.s32.totalorder %s27, 3
      %p144 = por %p142, %p143
      %p146 = scmp.ne.s32.totalorder %s129, %s145
      %p147 = scmp.eq.s32.totalorder %s27, 0
      %p148 = por %p146, %p147
      %p149 = scmp.le.s32.totalorder 1, %s21
      %p150 = scmp.lt.s32.totalorder %s21, 5
      %p151 = pnand %p149, %p150
      %p152 = pneg %p151
      // Predicated region
      $region9: #{tpu_custom_call.1} parent=5 // pred_check
        _
      $region10: #{tpu_custom_call.1} parent=5 // pred_check_branch
        %154 = sbr.rel (%p151) target = $region12
      $region11: #{tpu_custom_call.1} parent=5 // pred_region
        %s155 = ssub.s32 %s21, 1
        // Predicated region
        $region13: #{tpu_custom_call.1} parent=11 // pred_check
          %p156 = pneg %p68
        $region14: #{tpu_custom_call.1} parent=11 // pred_check_branch
          %158 = sbr.rel (%p156) target = $region16
        $region15: #{tpu_custom_call.1} parent=11 // pred_region
          %s160 = ssub.s32 1024, 1024
          %161 = vsyncadd [#allocation6], %s160
          %s162 = sshll.u32 [#allocation5], 4
          %s163 = int_to_ptr.vmem [resolvable:$true] %s162
          %168 = dma.hbm_to_vmem [thread:$0]  %s1, 1024, %s163, [#allocation6], 256, 256, 16
        $region16: #{tpu_custom_call.1} parent=11 // pred_fallthru
          _
        // Predicated region
        $region17: #{tpu_custom_call.1} parent=11 // pred_check
          %p169 = pneg %p89
        $region18: #{tpu_custom_call.1} parent=11 // pred_check_branch
          %171 = sbr.rel (%p169) target = $region20
        $region19: #{tpu_custom_call.1} parent=11 // pred_region
          _
        $region20: #{tpu_custom_call.1} parent=11 // pred_fallthru
          _
      $region12: #{tpu_custom_call.1} parent=5 // pred_fallthru
        _
      %p172 = scmp.lt.s32.totalorder %s21, 4
      // Predicated region
      $region21: #{tpu_custom_call.1} parent=5 // pred_check
        %p173 = pneg %p172
      $region22: #{tpu_custom_call.1} parent=5 // pred_check_branch
        %175 = sbr.rel (%p173) target = $region24
      $region23: #{tpu_custom_call.1} parent=5 // pred_region
        // Predicated region
        $region25: #{tpu_custom_call.1} parent=23 // pred_check
          %p176 = pneg %p41
        $region26: #{tpu_custom_call.1} parent=23 // pred_check_branch
          %178 = sbr.rel (%p176) target = $region28
        $region27: #{tpu_custom_call.1} parent=23 // pred_region
          %s179 = sand.u32 %s31, 1
          %s180 = scalar_lea.sflag [#allocation3], %s179
          %s181 = sand.u32 %s31, 1
          %s182 = smul.addr %s181, 8
          %s183 = scalar_lea.vmem [#allocation2], %s182
          %s185 = ssub.s32 128, 128
          %186 = vsyncadd %s180, %s185
          %s187 = smul.addr %s21, 128
          %s188 = scalar_lea.hbm %s0, %s187
          %s190 = sshll.u32 %s183, 4
          %s191 = int_to_ptr.vmem [resolvable:$true] %s190
          %193 = dma.hbm_to_vmem [thread:$0]  %s188, 128, %s191, %s180
        $region28: #{tpu_custom_call.1} parent=23 // pred_fallthru
          _
      $region24: #{tpu_custom_call.1} parent=5 // pred_fallthru
        _
      %p194 = scmp.le.s32.totalorder 1, %s21
      %p195 = scmp.lt.s32.totalorder %s21, 5
      %p196 = pnand %p194, %p195
      %p197 = pneg %p196
      // Predicated region
      $region29: #{tpu_custom_call.1} parent=5 // pred_check
        _
      $region30: #{tpu_custom_call.1} parent=5 // pred_check_branch
        %199 = sbr.rel (%p196) target = $region32
      $region31: #{tpu_custom_call.1} parent=5 // pred_region
        %s200 = ssub.s32 %s21, 1
        %s201 = sand.u32 %s34, 1
        %s202 = scalar_lea.sflag [#allocation3], %s201
        %s203 = sand.u32 %s34, 1
        %s204 = smul.addr %s203, 8
        %s205 = scalar_lea.vmem [#allocation2], %s204
        // Predicated region
        $region33: #{tpu_custom_call.1} parent=31 // pred_check
          %p206 = pneg %p47
        $region34: #{tpu_custom_call.1} parent=31 // pred_check_branch
          %208 = sbr.rel (%p206) target = $region36
        $region35: #{tpu_custom_call.1} parent=31 // pred_region
          %209 = dma.done %s202, 128
        $region36: #{tpu_custom_call.1} parent=31 // pred_fallthru
          _
        // Predicated region
        $region37: #{tpu_custom_call.1} parent=31 // pred_check
          %p210 = pneg %p68
        $region38: #{tpu_custom_call.1} parent=31 // pred_check_branch
          %212 = sbr.rel (%p210) target = $region40
        $region39: #{tpu_custom_call.1} parent=31 // pred_region
          %213 = dma.done [#allocation6], 1024
        $region40: #{tpu_custom_call.1} parent=31 // pred_fallthru
          _
        %s214 = sand.u32 %s34, 1
        %s215 = scalar_lea.sflag [#allocation3], %s214
        %s216 = sand.u32 %s34, 1
        %s217 = smul.addr %s216, 8
        %s218 = scalar_lea.vmem [#allocation2], %s217
        %p219 = pneg %p47
        %p220 = pneg %p44
        %p221 = pneg %p68
        %p222 = pneg %p65
        %p223 = pneg %p89
        %p224 = pneg %p86
        %p225 = pneg %p115
        %p226 = pneg %p112
        %s227 = sand.u32 %s102, 1
        %s228 = scalar_lea.sflag [#allocation4], %s227
        %s229 = sand.u32 %s102, 1
        %s230 = smul.addr %s229, 8
        %s231 = scalar_lea.vmem [#allocation7], %s230
        %p232 = pneg %p141
        %p233 = pneg %p138
        %s234 = sand.u32 %s128, 1
        %s235 = scalar_lea.sflag [#allocation9], %s234
        %s236 = sand.u32 %s128, 1
        %s237 = smul.addr %s236, 8
        %s238 = scalar_lea.vmem [#allocation8], %s237
        %v239 = vld [vmem:[%s205] sm:$0xff]
        %v240 = vld [vmem:[#allocation5] sm:$0xff]
        %v241 = vld [vmem:[#allocation5 + $0x8] sm:$0xff]
        %v242 = vld [vmem:[#allocation5 + $0x10] sm:$0xff]
        %v243 = vld [vmem:[#allocation5 + $0x18] sm:$0xff]
        %v244 = vld [vmem:[#allocation5 + $0x20] sm:$0xff]
        %v245 = vld [vmem:[#allocation5 + $0x28] sm:$0xff]
        %v246 = vld [vmem:[#allocation5 + $0x30] sm:$0xff]
        %v247 = vld [vmem:[#allocation5 + $0x38] sm:$0xff]
        %v248 = vld [vmem:[%s2] sm:$0x3]
        %v250 = vlaneseq
        %v251 = vshrl.u32 %v250, 7
        %v252 = vsub.s32 0, %v251
        %v253 = vrot.slane %v248, %v252
        %v254 = vlaneseq
        %v255 = vshrl.u32 %v254, 7
        %v256 = vsub.s32 1, %v255
        %v257 = vrot.slane %v248, %v256
        %vm260 = vcmask 261120
        %v262 = vsel %vm260, %v239, 0
        %264 = vmatprep.subr.mxu0 0.0
        %265 = vmatpush1.msra.mxu0 0.0
        %266 = vmatprep.subr.mxu0 0.0
        %267 = vmatpush1.msra.mxu0 0.0
        %268 = vmatprep.subr.mxu0 0.0
        %269 = vmatpush1.msra.mxu0 0.0
        %270 = vmatprep.subr.mxu0 0.0
        %271 = vmatpush1.msra.mxu0 0.0
        %272 = vmatprep.subr.mxu0 0.0
        %273 = vmatpush1.msra.mxu0 0.0
        %274 = vmatprep.subr.mxu0 0.0
        %275 = vmatpush1.msra.mxu0 0.0
        %276 = vmatprep.subr.mxu0 0.0
        %277 = vmatpush1.msra.mxu0 0.0
        %278 = vmatprep.subr.mxu0 0.0
        %279 = vmatpush1.msra.mxu0 0.0
        %280 = vmatprep.subr.mxu0 0.0
        %281 = vmatpush1.msra.mxu0 0.0
        %282 = vmatprep.subr.mxu0 0.0
        %283 = vmatpush1.msra.mxu0 0.0
        %284 = vmatprep.subr.mxu0 0.0
        %285 = vmatpush1.msra.mxu0 0.0
        %286 = vmatprep.subr.mxu0 0.0
        %287 = vmatpush1.msra.mxu0 0.0
        %v288 = vand.u32 %v247, 4294901760
        %289 = vmatprep.subr.mxu0 %v288
        %v290 = vand.u32 %v246, 4294901760
        %291 = vmatpush1.msra.mxu0 %v290
        %v292 = vand.u32 %v245, 4294901760
        %293 = vmatprep.subr.mxu0 %v292
        %v294 = vand.u32 %v244, 4294901760
        %295 = vmatpush1.msra.mxu0 %v294
        %v296 = vand.u32 %v243, 4294901760
        %297 = vmatprep.subr.mxu0 %v296
        %v298 = vand.u32 %v242, 4294901760
        %299 = vmatpush1.msra.mxu0 %v298
        %v300 = vand.u32 %v241, 4294901760
        %301 = vmatprep.subr.mxu0 %v300
        %v302 = vand.u32 %v240, 4294901760
        %303 = vmatpush1.msra.mxu0 %v302
        %304 = vmatprep.subr.mxu0 0.0
        %305 = vmatpush2.msra.mxu0 0.0
        %306 = vmatprep.subr.mxu0 0.0
        %307 = vmatpush2.msra.mxu0 0.0
        %308 = vmatprep.subr.mxu0 0.0
        %309 = vmatpush2.msra.mxu0 0.0
        %310 = vmatprep.subr.mxu0 0.0
        %311 = vmatpush2.msra.mxu0 0.0
        %312 = vmatprep.subr.mxu0 0.0
        %313 = vmatpush2.msra.mxu0 0.0
        %314 = vmatprep.subr.mxu0 0.0
        %315 = vmatpush2.msra.mxu0 0.0
        %316 = vmatprep.subr.mxu0 0.0
        %317 = vmatpush2.msra.mxu0 0.0
        %318 = vmatprep.subr.mxu0 0.0
        %319 = vmatpush2.msra.mxu0 0.0
        %320 = vmatprep.subr.mxu0 0.0
        %321 = vmatpush2.msra.mxu0 0.0
        %322 = vmatprep.subr.mxu0 0.0
        %323 = vmatpush2.msra.mxu0 0.0
        %324 = vmatprep.subr.mxu0 0.0
        %325 = vmatpush2.msra.mxu0 0.0
        %326 = vmatprep.subr.mxu0 0.0
        %327 = vmatpush2.msra.mxu0 0.0
        %328 = vmatprep.subr.mxu0 0.0
        %329 = vmatpush2.msra.mxu0 0.0
        %330 = vmatprep.subr.mxu0 0.0
        %331 = vmatpush2.msra.mxu0 0.0
        %332 = vmatprep.subr.mxu0 0.0
        %333 = vmatpush2.msra.mxu0 0.0
        %334 = vmatprep.subr.mxu0 0.0
        %335 = vmatpush2.msra.mxu0 0.0
        %336 = vmatprep.mubr.f32.mxu0 0.0
        %v337 = vand.u32 %v262, 4294901760
        %v338 = vsub.f32 %v262, %v337
        %v339 = vand.u32 %v338, 4294901760
        %v340 = vsub.f32 %v338, %v339
        %v341 = vand.u32 %v340, 4294901760
        %342 = vmatmul.mubr.f32.gmra.mxu0 %v341
        %v343 = vpop.f32.mrf.mxu0
        %v344 = vadd.f32 %v253, %v343
        %v345 = vpop.f32.mrf.mxu0
        %v346 = vadd.f32 %v257, %v345
        %347 = vdwg.mxu0
        %348 = vmatprep.subr.mxu0 0.0
        %349 = vmatpush1.msra.mxu0 0.0
        %350 = vmatprep.subr.mxu0 0.0
        %351 = vmatpush1.msra.mxu0 0.0
        %352 = vmatprep.subr.mxu0 0.0
        %353 = vmatpush1.msra.mxu0 0.0
        %354 = vmatprep.subr.mxu0 0.0
        %355 = vmatpush1.msra.mxu0 0.0
        %356 = vmatprep.subr.mxu0 0.0
        %357 = vmatpush1.msra.mxu0 0.0
        %358 = vmatprep.subr.mxu0 0.0
        %359 = vmatpush1.msra.mxu0 0.0
        %360 = vmatprep.subr.mxu0 0.0
        %361 = vmatpush1.msra.mxu0 0.0
        %362 = vmatprep.subr.mxu0 0.0
        %363 = vmatpush1.msra.mxu0 0.0
        %364 = vmatprep.subr.mxu0 0.0
        %365 = vmatpush1.msra.mxu0 0.0
        %366 = vmatprep.subr.mxu0 0.0
        %367 = vmatpush1.msra.mxu0 0.0
        %368 = vmatprep.subr.mxu0 0.0
        %369 = vmatpush1.msra.mxu0 0.0
        %370 = vmatprep.subr.mxu0 0.0
        %371 = vmatpush1.msra.mxu0 0.0
        %v372 = vand.u32 %v247, 4294901760
        %v373 = vsub.f32 %v247, %v372
        %v374 = vand.u32 %v373, 4294901760
        %v375 = vsub.f32 %v373, %v374
        %v376 = vand.u32 %v375, 4294901760
        %377 = vmatprep.subr.mxu0 %v376
        %v378 = vand.u32 %v246, 4294901760
        %v379 = vsub.f32 %v246, %v378
        %v380 = vand.u32 %v379, 4294901760
        %v381 = vsub.f32 %v379, %v380
        %v382 = vand.u32 %v381, 4294901760
        %383 = vmatpush1.msra.mxu0 %v382
        %v384 = vand.u32 %v245, 4294901760
        %v385 = vsub.f32 %v245, %v384
        %v386 = vand.u32 %v385, 4294901760
        %v387 = vsub.f32 %v385, %v386
        %v388 = vand.u32 %v387, 4294901760
        %389 = vmatprep.subr.mxu0 %v388
        %v390 = vand.u32 %v244, 4294901760
        %v391 = vsub.f32 %v244, %v390
        %v392 = vand.u32 %v391, 4294901760
        %v393 = vsub.f32 %v391, %v392
        %v394 = vand.u32 %v393, 4294901760
        %395 = vmatpush1.msra.mxu0 %v394
        %v396 = vand.u32 %v243, 4294901760
        %v397 = vsub.f32 %v243, %v396
        %v398 = vand.u32 %v397, 4294901760
        %v399 = vsub.f32 %v397, %v398
        %v400 = vand.u32 %v399, 4294901760
        %401 = vmatprep.subr.mxu0 %v400
        %v402 = vand.u32 %v242, 4294901760
        %v403 = vsub.f32 %v242, %v402
        %v404 = vand.u32 %v403, 4294901760
        %v405 = vsub.f32 %v403, %v404
        %v406 = vand.u32 %v405, 4294901760
        %407 = vmatpush1.msra.mxu0 %v406
        %v408 = vand.u32 %v241, 4294901760
        %v409 = vsub.f32 %v241, %v408
        %v410 = vand.u32 %v409, 4294901760
        %v411 = vsub.f32 %v409, %v410
        %v412 = vand.u32 %v411, 4294901760
        %413 = vmatprep.subr.mxu0 %v412
        %v414 = vand.u32 %v240, 4294901760
        %v415 = vsub.f32 %v240, %v414
        %v416 = vand.u32 %v415, 4294901760
        %v417 = vsub.f32 %v415, %v416
        %v418 = vand.u32 %v417, 4294901760
        %419 = vmatpush1.msra.mxu0 %v418
        %420 = vmatprep.subr.mxu0 0.0
        %421 = vmatpush2.msra.mxu0 0.0
        %422 = vmatprep.subr.mxu0 0.0
        %423 = vmatpush2.msra.mxu0 0.0
        %424 = vmatprep.subr.mxu0 0.0
        %425 = vmatpush2.msra.mxu0 0.0
        %426 = vmatprep.subr.mxu0 0.0
        %427 = vmatpush2.msra.mxu0 0.0
        %428 = vmatprep.subr.mxu0 0.0
        %429 = vmatpush2.msra.mxu0 0.0
        %430 = vmatprep.subr.mxu0 0.0
        %431 = vmatpush2.msra.mxu0 0.0
        %432 = vmatprep.subr.mxu0 0.0
        %433 = vmatpush2.msra.mxu0 0.0
        %434 = vmatprep.subr.mxu0 0.0
        %435 = vmatpush2.msra.mxu0 0.0
        %436 = vmatprep.subr.mxu0 0.0
        %437 = vmatpush2.msra.mxu0 0.0
        %438 = vmatprep.subr.mxu0 0.0
        %439 = vmatpush2.msra.mxu0 0.0
        %440 = vmatprep.subr.mxu0 0.0
        %441 = vmatpush2.msra.mxu0 0.0
        %442 = vmatprep.subr.mxu0 0.0
        %443 = vmatpush2.msra.mxu0 0.0
        %444 = vmatprep.subr.mxu0 0.0
        %445 = vmatpush2.msra.mxu0 0.0
        %446 = vmatprep.subr.mxu0 0.0
        %447 = vmatpush2.msra.mxu0 0.0
        %448 = vmatprep.subr.mxu0 0.0
        %449 = vmatpush2.msra.mxu0 0.0
        %450 = vmatprep.subr.mxu0 0.0
        %451 = vmatpush2.msra.mxu0 0.0
        %452 = vmatprep.mubr.f32.mxu0 0.0
        %v453 = vand.u32 %v262, 4294901760
        %454 = vmatmul.mubr.f32.gmra.mxu0 %v453
        %v455 = vpop.f32.mrf.mxu0
        %v456 = vadd.f32 %v344, %v455
        %v457 = vpop.f32.mrf.mxu0
        %v458 = vadd.f32 %v346, %v457
        %459 = vdwg.mxu0
        %460 = vmatprep.subr.mxu0 0.0
        %461 = vmatpush1.msra.mxu0 0.0
        %462 = vmatprep.subr.mxu0 0.0
        %463 = vmatpush1.msra.mxu0 0.0
        %464 = vmatprep.subr.mxu0 0.0
        %465 = vmatpush1.msra.mxu0 0.0
        %466 = vmatprep.subr.mxu0 0.0
        %467 = vmatpush1.msra.mxu0 0.0
        %468 = vmatprep.subr.mxu0 0.0
        %469 = vmatpush1.msra.mxu0 0.0
        %470 = vmatprep.subr.mxu0 0.0
        %471 = vmatpush1.msra.mxu0 0.0
        %472 = vmatprep.subr.mxu0 0.0
        %473 = vmatpush1.msra.mxu0 0.0
        %474 = vmatprep.subr.mxu0 0.0
        %475 = vmatpush1.msra.mxu0 0.0
        %476 = vmatprep.subr.mxu0 0.0
        %477 = vmatpush1.msra.mxu0 0.0
        %478 = vmatprep.subr.mxu0 0.0
        %479 = vmatpush1.msra.mxu0 0.0
        %480 = vmatprep.subr.mxu0 0.0
        %481 = vmatpush1.msra.mxu0 0.0
        %482 = vmatprep.subr.mxu0 0.0
        %483 = vmatpush1.msra.mxu0 0.0
        %v484 = vand.u32 %v247, 4294901760
        %v485 = vsub.f32 %v247, %v484
        %486 = vmatprep.subr.mxu0 %v485
        %v487 = vand.u32 %v246, 4294901760
        %v488 = vsub.f32 %v246, %v487
        %489 = vmatpush1.msra.mxu0 %v488
        %v490 = vand.u32 %v245, 4294901760
        %v491 = vsub.f32 %v245, %v490
        %492 = vmatprep.subr.mxu0 %v491
        %v493 = vand.u32 %v244, 4294901760
        %v494 = vsub.f32 %v244, %v493
        %495 = vmatpush1.msra.mxu0 %v494
        %v496 = vand.u32 %v243, 4294901760
        %v497 = vsub.f32 %v243, %v496
        %498 = vmatprep.subr.mxu0 %v497
        %v499 = vand.u32 %v242, 4294901760
        %v500 = vsub.f32 %v242, %v499
        %501 = vmatpush1.msra.mxu0 %v500
        %v502 = vand.u32 %v241, 4294901760
        %v503 = vsub.f32 %v241, %v502
        %504 = vmatprep.subr.mxu0 %v503
        %v505 = vand.u32 %v240, 4294901760
        %v506 = vsub.f32 %v240, %v505
        %507 = vmatpush1.msra.mxu0 %v506
        %508 = vmatprep.subr.mxu0 0.0
        %509 = vmatpush2.msra.mxu0 0.0
        %510 = vmatprep.subr.mxu0 0.0
        %511 = vmatpush2.msra.mxu0 0.0
        %512 = vmatprep.subr.mxu0 0.0
        %513 = vmatpush2.msra.mxu0 0.0
        %514 = vmatprep.subr.mxu0 0.0
        %515 = vmatpush2.msra.mxu0 0.0
        %516 = vmatprep.subr.mxu0 0.0
        %517 = vmatpush2.msra.mxu0 0.0
        %518 = vmatprep.subr.mxu0 0.0
        %519 = vmatpush2.msra.mxu0 0.0
        %520 = vmatprep.subr.mxu0 0.0
        %521 = vmatpush2.msra.mxu0 0.0
        %522 = vmatprep.subr.mxu0 0.0
        %523 = vmatpush2.msra.mxu0 0.0
        %524 = vmatprep.subr.mxu0 0.0
        %525 = vmatpush2.msra.mxu0 0.0
        %526 = vmatprep.subr.mxu0 0.0
        %527 = vmatpush2.msra.mxu0 0.0
        %528 = vmatprep.subr.mxu0 0.0
        %529 = vmatpush2.msra.mxu0 0.0
        %530 = vmatprep.subr.mxu0 0.0
        %531 = vmatpush2.msra.mxu0 0.0
        %532 = vmatprep.subr.mxu0 0.0
        %533 = vmatpush2.msra.mxu0 0.0
        %534 = vmatprep.subr.mxu0 0.0
        %535 = vmatpush2.msra.mxu0 0.0
        %536 = vmatprep.subr.mxu0 0.0
        %537 = vmatpush2.msra.mxu0 0.0
        %538 = vmatprep.subr.mxu0 0.0
        %539 = vmatpush2.msra.mxu0 0.0
        %540 = vmatprep.mubr.f32.mxu0 0.0
        %v541 = vand.u32 %v262, 4294901760
        %v542 = vsub.f32 %v262, %v541
        %543 = vmatmul.mubr.f32.gmra.mxu0 %v542
        %v544 = vpop.f32.mrf.mxu0
        %v545 = vadd.f32 %v456, %v544
        %v546 = vpop.f32.mrf.mxu0
        %v547 = vadd.f32 %v458, %v546
        %548 = vdwg.mxu0
        %549 = vmatprep.subr.mxu0 0.0
        %550 = vmatpush1.msra.mxu0 0.0
        %551 = vmatprep.subr.mxu0 0.0
        %552 = vmatpush1.msra.mxu0 0.0
        %553 = vmatprep.subr.mxu0 0.0
        %554 = vmatpush1.msra.mxu0 0.0
        %555 = vmatprep.subr.mxu0 0.0
        %556 = vmatpush1.msra.mxu0 0.0
        %557 = vmatprep.subr.mxu0 0.0
        %558 = vmatpush1.msra.mxu0 0.0
        %559 = vmatprep.subr.mxu0 0.0
        %560 = vmatpush1.msra.mxu0 0.0
        %561 = vmatprep.subr.mxu0 0.0
        %562 = vmatpush1.msra.mxu0 0.0
        %563 = vmatprep.subr.mxu0 0.0
        %564 = vmatpush1.msra.mxu0 0.0
        %565 = vmatprep.subr.mxu0 0.0
        %566 = vmatpush1.msra.mxu0 0.0
        %567 = vmatprep.subr.mxu0 0.0
        %568 = vmatpush1.msra.mxu0 0.0
        %569 = vmatprep.subr.mxu0 0.0
        %570 = vmatpush1.msra.mxu0 0.0
        %571 = vmatprep.subr.mxu0 0.0
        %572 = vmatpush1.msra.mxu0 0.0
        %v573 = vand.u32 %v247, 4294901760
        %574 = vmatprep.subr.mxu0 %v573
        %v575 = vand.u32 %v246, 4294901760
        %576 = vmatpush1.msra.mxu0 %v575
        %v577 = vand.u32 %v245, 4294901760
        %578 = vmatprep.subr.mxu0 %v577
        %v579 = vand.u32 %v244, 4294901760
        %580 = vmatpush1.msra.mxu0 %v579
        %v581 = vand.u32 %v243, 4294901760
        %582 = vmatprep.subr.mxu0 %v581
        %v583 = vand.u32 %v242, 4294901760
        %584 = vmatpush1.msra.mxu0 %v583
        %v585 = vand.u32 %v241, 4294901760
        %586 = vmatprep.subr.mxu0 %v585
        %v587 = vand.u32 %v240, 4294901760
        %588 = vmatpush1.msra.mxu0 %v587
        %589 = vmatprep.subr.mxu0 0.0
        %590 = vmatpush2.msra.mxu0 0.0
        %591 = vmatprep.subr.mxu0 0.0
        %592 = vmatpush2.msra.mxu0 0.0
        %593 = vmatprep.subr.mxu0 0.0
        %594 = vmatpush2.msra.mxu0 0.0
        %595 = vmatprep.subr.mxu0 0.0
        %596 = vmatpush2.msra.mxu0 0.0
        %597 = vmatprep.subr.mxu0 0.0
        %598 = vmatpush2.msra.mxu0 0.0
        %599 = vmatprep.subr.mxu0 0.0
        %600 = vmatpush2.msra.mxu0 0.0
        %601 = vmatprep.subr.mxu0 0.0
        %602 = vmatpush2.msra.mxu0 0.0
        %603 = vmatprep.subr.mxu0 0.0
        %604 = vmatpush2.msra.mxu0 0.0
        %605 = vmatprep.subr.mxu0 0.0
        %606 = vmatpush2.msra.mxu0 0.0
        %607 = vmatprep.subr.mxu0 0.0
        %608 = vmatpush2.msra.mxu0 0.0
        %609 = vmatprep.subr.mxu0 0.0
        %610 = vmatpush2.msra.mxu0 0.0
        %611 = vmatprep.subr.mxu0 0.0
        %612 = vmatpush2.msra.mxu0 0.0
        %613 = vmatprep.subr.mxu0 0.0
        %614 = vmatpush2.msra.mxu0 0.0
        %615 = vmatprep.subr.mxu0 0.0
        %616 = vmatpush2.msra.mxu0 0.0
        %617 = vmatprep.subr.mxu0 0.0
        %618 = vmatpush2.msra.mxu0 0.0
        %619 = vmatprep.subr.mxu0 0.0
        %620 = vmatpush2.msra.mxu0 0.0
        %621 = vmatprep.mubr.f32.mxu0 0.0
        %v622 = vand.u32 %v262, 4294901760
        %v623 = vsub.f32 %v262, %v622
        %v624 = vand.u32 %v623, 4294901760
        %625 = vmatmul.mubr.f32.gmra.mxu0 %v624
        %v626 = vpop.f32.mrf.mxu0
        %v627 = vadd.f32 %v545, %v626
        %v628 = vpop.f32.mrf.mxu0
        %v629 = vadd.f32 %v547, %v628
        %630 = vdwg.mxu0
        %631 = vmatprep.subr.mxu0 0.0
        %632 = vmatpush1.msra.mxu0 0.0
        %633 = vmatprep.subr.mxu0 0.0
        %634 = vmatpush1.msra.mxu0 0.0
        %635 = vmatprep.subr.mxu0 0.0
        %636 = vmatpush1.msra.mxu0 0.0
        %637 = vmatprep.subr.mxu0 0.0
        %638 = vmatpush1.msra.mxu0 0.0
        %639 = vmatprep.subr.mxu0 0.0
        %640 = vmatpush1.msra.mxu0 0.0
        %641 = vmatprep.subr.mxu0 0.0
        %642 = vmatpush1.msra.mxu0 0.0
        %643 = vmatprep.subr.mxu0 0.0
        %644 = vmatpush1.msra.mxu0 0.0
        %645 = vmatprep.subr.mxu0 0.0
        %646 = vmatpush1.msra.mxu0 0.0
        %647 = vmatprep.subr.mxu0 0.0
        %648 = vmatpush1.msra.mxu0 0.0
        %649 = vmatprep.subr.mxu0 0.0
        %650 = vmatpush1.msra.mxu0 0.0
        %651 = vmatprep.subr.mxu0 0.0
        %652 = vmatpush1.msra.mxu0 0.0
        %653 = vmatprep.subr.mxu0 0.0
        %654 = vmatpush1.msra.mxu0 0.0
        %v655 = vand.u32 %v247, 4294901760
        %v656 = vsub.f32 %v247, %v655
        %v657 = vand.u32 %v656, 4294901760
        %658 = vmatprep.subr.mxu0 %v657
        %v659 = vand.u32 %v246, 4294901760
        %v660 = vsub.f32 %v246, %v659
        %v661 = vand.u32 %v660, 4294901760
        %662 = vmatpush1.msra.mxu0 %v661
        %v663 = vand.u32 %v245, 4294901760
        %v664 = vsub.f32 %v245, %v663
        %v665 = vand.u32 %v664, 4294901760
        %666 = vmatprep.subr.mxu0 %v665
        %v667 = vand.u32 %v244, 4294901760
        %v668 = vsub.f32 %v244, %v667
        %v669 = vand.u32 %v668, 4294901760
        %670 = vmatpush1.msra.mxu0 %v669
        %v671 = vand.u32 %v243, 4294901760
        %v672 = vsub.f32 %v243, %v671
        %v673 = vand.u32 %v672, 4294901760
        %674 = vmatprep.subr.mxu0 %v673
        %v675 = vand.u32 %v242, 4294901760
        %v676 = vsub.f32 %v242, %v675
        %v677 = vand.u32 %v676, 4294901760
        %678 = vmatpush1.msra.mxu0 %v677
        %v679 = vand.u32 %v241, 4294901760
        %v680 = vsub.f32 %v241, %v679
        %v681 = vand.u32 %v680, 4294901760
        %682 = vmatprep.subr.mxu0 %v681
        %v683 = vand.u32 %v240, 4294901760
        %v684 = vsub.f32 %v240, %v683
        %v685 = vand.u32 %v684, 4294901760
        %686 = vmatpush1.msra.mxu0 %v685
        %687 = vmatprep.subr.mxu0 0.0
        %688 = vmatpush2.msra.mxu0 0.0
        %689 = vmatprep.subr.mxu0 0.0
        %690 = vmatpush2.msra.mxu0 0.0
        %691 = vmatprep.subr.mxu0 0.0
        %692 = vmatpush2.msra.mxu0 0.0
        %693 = vmatprep.subr.mxu0 0.0
        %694 = vmatpush2.msra.mxu0 0.0
        %695 = vmatprep.subr.mxu0 0.0
        %696 = vmatpush2.msra.mxu0 0.0
        %697 = vmatprep.subr.mxu0 0.0
        %698 = vmatpush2.msra.mxu0 0.0
        %699 = vmatprep.subr.mxu0 0.0
        %700 = vmatpush2.msra.mxu0 0.0
        %701 = vmatprep.subr.mxu0 0.0
        %702 = vmatpush2.msra.mxu0 0.0
        %703 = vmatprep.subr.mxu0 0.0
        %704 = vmatpush2.msra.mxu0 0.0
        %705 = vmatprep.subr.mxu0 0.0
        %706 = vmatpush2.msra.mxu0 0.0
        %707 = vmatprep.subr.mxu0 0.0
        %708 = vmatpush2.msra.mxu0 0.0
        %709 = vmatprep.subr.mxu0 0.0
        %710 = vmatpush2.msra.mxu0 0.0
        %711 = vmatprep.subr.mxu0 0.0
        %712 = vmatpush2.msra.mxu0 0.0
        %713 = vmatprep.subr.mxu0 0.0
        %714 = vmatpush2.msra.mxu0 0.0
        %715 = vmatprep.subr.mxu0 0.0
        %716 = vmatpush2.msra.mxu0 0.0
        %717 = vmatprep.subr.mxu0 0.0
        %718 = vmatpush2.msra.mxu0 0.0
        %719 = vmatprep.mubr.f32.mxu0 0.0
        %v720 = vand.u32 %v262, 4294901760
        %721 = vmatmul.mubr.f32.gmra.mxu0 %v720
        %v722 = vpop.f32.mrf.mxu0
        %v723 = vadd.f32 %v627, %v722
        %v724 = vpop.f32.mrf.mxu0
        %v725 = vadd.f32 %v629, %v724
        %726 = vdwg.mxu0
        %727 = vmatprep.subr.mxu0 0.0
        %728 = vmatpush1.msra.mxu0 0.0
        %729 = vmatprep.subr.mxu0 0.0
        %730 = vmatpush1.msra.mxu0 0.0
        %731 = vmatprep.subr.mxu0 0.0
        %732 = vmatpush1.msra.mxu0 0.0
        %733 = vmatprep.subr.mxu0 0.0
        %734 = vmatpush1.msra.mxu0 0.0
        %735 = vmatprep.subr.mxu0 0.0
        %736 = vmatpush1.msra.mxu0 0.0
        %737 = vmatprep.subr.mxu0 0.0
        %738 = vmatpush1.msra.mxu0 0.0
        %739 = vmatprep.subr.mxu0 0.0
        %740 = vmatpush1.msra.mxu0 0.0
        %741 = vmatprep.subr.mxu0 0.0
        %742 = vmatpush1.msra.mxu0 0.0
        %743 = vmatprep.subr.mxu0 0.0
        %744 = vmatpush1.msra.mxu0 0.0
        %745 = vmatprep.subr.mxu0 0.0
        %746 = vmatpush1.msra.mxu0 0.0
        %747 = vmatprep.subr.mxu0 0.0
        %748 = vmatpush1.msra.mxu0 0.0
        %749 = vmatprep.subr.mxu0 0.0
        %750 = vmatpush1.msra.mxu0 0.0
        %v751 = vand.u32 %v247, 4294901760
        %752 = vmatprep.subr.mxu0 %v751
        %v753 = vand.u32 %v246, 4294901760
        %754 = vmatpush1.msra.mxu0 %v753
        %v755 = vand.u32 %v245, 4294901760
        %756 = vmatprep.subr.mxu0 %v755
        %v757 = vand.u32 %v244, 4294901760
        %758 = vmatpush1.msra.mxu0 %v757
        %v759 = vand.u32 %v243, 4294901760
        %760 = vmatprep.subr.mxu0 %v759
        %v761 = vand.u32 %v242, 4294901760
        %762 = vmatpush1.msra.mxu0 %v761
        %v763 = vand.u32 %v241, 4294901760
        %764 = vmatprep.subr.mxu0 %v763
        %v765 = vand.u32 %v240, 4294901760
        %766 = vmatpush1.msra.mxu0 %v765
        %767 = vmatprep.subr.mxu0 0.0
        %768 = vmatpush2.msra.mxu0 0.0
        %769 = vmatprep.subr.mxu0 0.0
        %770 = vmatpush2.msra.mxu0 0.0
        %771 = vmatprep.subr.mxu0 0.0
        %772 = vmatpush2.msra.mxu0 0.0
        %773 = vmatprep.subr.mxu0 0.0
        %774 = vmatpush2.msra.mxu0 0.0
        %775 = vmatprep.subr.mxu0 0.0
        %776 = vmatpush2.msra.mxu0 0.0
        %777 = vmatprep.subr.mxu0 0.0
        %778 = vmatpush2.msra.mxu0 0.0
        %779 = vmatprep.subr.mxu0 0.0
        %780 = vmatpush2.msra.mxu0 0.0
        %781 = vmatprep.subr.mxu0 0.0
        %782 = vmatpush2.msra.mxu0 0.0
        %783 = vmatprep.subr.mxu0 0.0
        %784 = vmatpush2.msra.mxu0 0.0
        %785 = vmatprep.subr.mxu0 0.0
        %786 = vmatpush2.msra.mxu0 0.0
        %787 = vmatprep.subr.mxu0 0.0
        %788 = vmatpush2.msra.mxu0 0.0
        %789 = vmatprep.subr.mxu0 0.0
        %790 = vmatpush2.msra.mxu0 0.0
        %791 = vmatprep.subr.mxu0 0.0
        %792 = vmatpush2.msra.mxu0 0.0
        %793 = vmatprep.subr.mxu0 0.0
        %794 = vmatpush2.msra.mxu0 0.0
        %795 = vmatprep.subr.mxu0 0.0
        %796 = vmatpush2.msra.mxu0 0.0
        %797 = vmatprep.subr.mxu0 0.0
        %798 = vmatpush2.msra.mxu0 0.0
        %799 = vmatprep.mubr.f32.mxu0 0.0
        %v800 = vand.u32 %v262, 4294901760
        %801 = vmatmul.mubr.f32.gmra.mxu0 %v800
        %v802 = vpop.f32.mrf.mxu0
        %v803 = vadd.f32 %v723, %v802
        %v804 = vpop.f32.mrf.mxu0
        %v805 = vadd.f32 %v725, %v804
        %806 = vdwg.mxu0
        %807 = vst [vmem:[%s231] sm:$0xff] %v803
        %808 = vst [vmem:[%s238] sm:$0xff] %v805
        %s809 = sand.u32 %s102, 1
        %s810 = scalar_lea.sflag [#allocation4], %s809
        %s811 = sand.u32 %s102, 1
        %s812 = smul.addr %s811, 8
        %s813 = scalar_lea.vmem [#allocation7], %s812
        %s814 = sand.u32 %s128, 1
        %s815 = scalar_lea.sflag [#allocation9], %s814
        %s816 = sand.u32 %s128, 1
        %s817 = smul.addr %s816, 8
        %s818 = scalar_lea.vmem [#allocation8], %s817
        // Predicated region
        $region41: #{tpu_custom_call.1} parent=31 // pred_check
          %p819 = pneg %p112
        $region42: #{tpu_custom_call.1} parent=31 // pred_check_branch
          %821 = sbr.rel (%p819) target = $region44
        $region43: #{tpu_custom_call.1} parent=31 // pred_region
          %s823 = ssub.s32 128, 128
          %824 = vsyncadd %s810, %s823
          %s825 = smul.addr %s26, 128
          %s826 = scalar_lea.hbm %s3, %s825
          %s828 = sshll.u32 %s813, 4
          %s829 = int_to_ptr.vmem [resolvable:$true] %s828
          %831 = dma.vmem_to_hbm [thread:$0]  %s829, 128, %s826, %s810
        $region44: #{tpu_custom_call.1} parent=31 // pred_fallthru
          _
        // Predicated region
        $region45: #{tpu_custom_call.1} parent=31 // pred_check
          %p832 = pneg %p138
        $region46: #{tpu_custom_call.1} parent=31 // pred_check_branch
          %834 = sbr.rel (%p832) target = $region48
        $region47: #{tpu_custom_call.1} parent=31 // pred_region
          %s836 = ssub.s32 128, 128
          %837 = vsyncadd %s815, %s836
          %s838 = smul.addr %s26, 128
          %s839 = scalar_lea.hbm %s4, %s838
          %s841 = sshll.u32 %s818, 4
          %s842 = int_to_ptr.vmem [resolvable:$true] %s841
          %844 = dma.vmem_to_hbm [thread:$0]  %s842, 128, %s839, %s815
        $region48: #{tpu_custom_call.1} parent=31 // pred_fallthru
          _
      $region32: #{tpu_custom_call.1} parent=5 // pred_fallthru
        _
      %p845 = scmp.le.s32.totalorder 2, %s21
      // Predicated region
      $region49: #{tpu_custom_call.1} parent=5 // pred_check
        %p846 = pneg %p845
      $region50: #{tpu_custom_call.1} parent=5 // pred_check_branch
        %848 = sbr.rel (%p846) target = $region52
      $region51: #{tpu_custom_call.1} parent=5 // pred_region
        %s849 = ssub.s32 %s21, 2
        // Predicated region
        $region53: #{tpu_custom_call.1} parent=51 // pred_check
          %p850 = pneg %p118
        $region54: #{tpu_custom_call.1} parent=51 // pred_check_branch
          %852 = sbr.rel (%p850) target = $region56
        $region55: #{tpu_custom_call.1} parent=51 // pred_region
          %s853 = sand.u32 %s103, 1
          %s854 = scalar_lea.sflag [#allocation4], %s853
          %s855 = sand.u32 %s103, 1
          %s856 = smul.addr %s855, 8
          %s857 = scalar_lea.vmem [#allocation7], %s856
          %858 = dma.done %s854, 128
        $region56: #{tpu_custom_call.1} parent=51 // pred_fallthru
          _
        // Predicated region
        $region57: #{tpu_custom_call.1} parent=51 // pred_check
          %p859 = pneg %p144
        $region58: #{tpu_custom_call.1} parent=51 // pred_check_branch
          %861 = sbr.rel (%p859) target = $region60
        $region59: #{tpu_custom_call.1} parent=51 // pred_region
          %s862 = sand.u32 %s129, 1
          %s863 = scalar_lea.sflag [#allocation9], %s862
          %s864 = sand.u32 %s129, 1
          %s865 = smul.addr %s864, 8
          %s866 = scalar_lea.vmem [#allocation8], %s865
          %867 = dma.done %s863, 128
        $region60: #{tpu_custom_call.1} parent=51 // pred_fallthru
          _
      $region52: #{tpu_custom_call.1} parent=5 // pred_fallthru
        _
    $region6: #{tpu_custom_call.1} parent=1 // loop_footer
      %s25 = sadd.s32 1, %s21
    $region7: #{tpu_custom_call.1} parent=1 // loop_footer_branch
      %20 = sbr.rel target = $region3
    $region8: #{tpu_custom_call.1} parent=1 // loop_exit
      _
    %868 = vsyncpa [#allocation3], 1
    %s869 = scalar_lea.sflag [#allocation3], 1
    %870 = vsyncpa %s869, 1
    %871 = vsyncpa [#allocation6], 1
    %872 = vsyncpa [#allocation4], 1
    %s873 = scalar_lea.sflag [#allocation4], 1
    %874 = vsyncpa %s873, 1
    %875 = vsyncpa [#allocation9], 1
    %s876 = scalar_lea.sflag [#allocation9], 1
    %877 = vsyncpa %s876, 1

</llo_original>
